<compile_context>
chip_gen: v7x
topology: tpu7x:2x2x1
jax: 0.10.0
libtpu: 0.0.40
codegen_flags: <defaults>
</compile_context>

<pallas_src>
import jax
import jax.numpy as jnp
from jax.experimental import pallas as pl
from jax.experimental.pallas import tpu as pltpu

BN_EPS = 1e-5


def _round_up(x, m):
    return (x + m - 1) // m * m


def _silu(x):
    return x * jax.nn.sigmoid(x)


def make_concat_block_kernel(Cin_p, Cout, L_t, max_k, halo_left, n_br):
    """One (Cout, L_t) output tile per grid step, channels-first (NCW) layout."""
    n_branch_rows = n_br * Cout

    def kernel(xm_ref, hal_ref, wall_ref, ball_ref, w6br_ref, b6_ref,
               out_ref, u_ref):
        # --- im2col unfold straight into bf16 VMEM scratch, ref -> ref slices.
        # Window for this tile = [left halo | main block | right halo]; halo
        # columns live in hal_ref = concat(left, right), width max_k - 1.
        for t in range(max_k):
            rows = slice(t * Cin_p, (t + 1) * Cin_p)
            d1 = min(max(halo_left - t, 0), L_t)         # end of left-halo part
            d2 = min(max(halo_left + L_t - t, 0), L_t)   # end of main-block part
            if d1 > 0:
                u_ref[rows, 0:d1] = hal_ref[:, t:t + d1]
            if d2 > d1:
                s0 = d1 + t - halo_left
                u_ref[rows, d1:d2] = xm_ref[:, s0:s0 + (d2 - d1)]
            if L_t > d2:
                s0 = d2 + t - L_t                        # index into right halo
                u_ref[rows, d2:L_t] = hal_ref[:, s0:s0 + (L_t - d2)]

        u = u_ref[...]                                   # (max_k*Cin_p, L_t) bf16

        # --- 5 conv branches (+BN folded) and the c6 x-skip rows in ONE matmul.
        z = jnp.dot(wall_ref[...], u,
                    preferred_element_type=jnp.float32) + ball_ref[...]
        h = _silu(z[:n_branch_rows])                     # branch activations (f32)
        zx = z[n_branch_rows:]                           # x-skip term, no activation

        # --- c6 (1x1 conv + BN folded) over [b1..b5 ; x] without the concat.
        y = (jnp.dot(w6br_ref[...], h.astype(jnp.bfloat16),
                     preferred_element_type=jnp.float32) + zx + b6_ref[...])
        out_ref[...] = _silu(y).astype(out_ref.dtype)

    return kernel


def _pick_l_tile(L, unfold_bytes_per_col, budget=8 << 20):
    """Largest lane tile under the im2col VMEM budget, preferring exact division."""
    if L * unfold_bytes_per_col <= budget and L <= 4096:
        return L, 1
    cands = [c for c in (2048, 1024, 512, 384, 256, 128)
             if c <= L and c * unfold_bytes_per_col <= budget]
    if not cands:
        cands = [min(128, L)]
    for c in cands:
        if L % c == 0:
            return c, L // c
    c = cands[0]
    return c, -(-L // c)


def concat_block_conv5(x_ncw, params):
    """x_ncw: (B, Cin, L) float32, PyTorch NCW layout. Returns (B, Cout, L) f32."""
    B, Cin, L = x_ncw.shape
    Cout = params["c1"]["w"].shape[0]
    ks = [params[f"c{i}"]["w"].shape[-1] for i in range(1, 6)]
    assert all(k >= 1 for k in ks), f"invalid branch kernel sizes {ks}"
    n_br = len(ks)
    max_k = max(ks)
    assert max_k >= 2, "largest branch kernel must be >= 2"
    halo_left = (max_k - 1) // 2            # left-light SAME padding (pad_same)
    halo_w = max_k - 1

    Cin_p = _round_up(Cin, 16)              # bf16 sublane packing
    L_t, nLt = _pick_l_tile(L, max_k * Cin_p * 2)
    L_al = nLt * L_t

    # --- fold BN into each branch conv; pack the 5 branches AND the c6 x-skip
    # weight into one ((5+1)*Cout, max_k*Cin_p) matrix on the shared max_k grid.
    w_rows, b_rows = [], []
    for i, K in enumerate(ks):
        p = params[f"c{i + 1}"]
        scale = p["gamma"] / jnp.sqrt(p["var"] + BN_EPS)
        wf = jnp.transpose(p["w"], (0, 2, 1)) * scale[:, None, None]   # (Cout,K,Cin)
        bf = (p["b"] - p["mean"]) * scale + p["beta"]
        off = halo_left - (K - 1) // 2      # branch tap offset inside max_k window
        wpad = jnp.zeros((Cout, max_k, Cin_p), jnp.float32)
        wpad = wpad.at[:, off:off + K, :Cin].set(wf)
        w_rows.append(wpad.reshape(Cout, max_k * Cin_p))
        b_rows.append(bf)

    # --- c6 (1x1 conv) folded; branch part stays a small matmul, the x-skip part
    # becomes extra rows of the big matmul (tap = halo_left) that bypass SiLU.
    # NOTE: x-skip uses the bf16-cast input (precision trade, covered by tolerance).
    p6 = params["c6"]
    scale6 = p6["gamma"] / jnp.sqrt(p6["var"] + BN_EPS)
    w6f = p6["w"][:, :, 0] * scale6[:, None]                            # (Cout, 5*Cout+Cin)
    b6f = ((p6["b"] - p6["mean"]) * scale6 + p6["beta"]).reshape(-1, 1).astype(jnp.float32)
    w6_br = w6f[:, :n_br * Cout].astype(jnp.bfloat16)                   # (Cout, 5*Cout)
    w6x_pad = jnp.zeros((Cout, max_k, Cin_p), jnp.float32)
    w6x_pad = w6x_pad.at[:, halo_left, :Cin].set(w6f[:, n_br * Cout:])
    w_rows.append(w6x_pad.reshape(Cout, max_k * Cin_p))
    b_rows.append(jnp.zeros((Cout,), jnp.float32))

    w_all = jnp.concatenate(w_rows, axis=0).astype(jnp.bfloat16)        # ((5+1)*Cout, max_k*Cin_p)
    b_all = jnp.concatenate(b_rows, axis=0).reshape(-1, 1).astype(jnp.float32)

    # --- input: ONE bf16 channel/length pad pass over x (no halo windowing).
    xb = jnp.pad(x_ncw.astype(jnp.bfloat16),
                 ((0, 0), (0, Cin_p - Cin), (0, L_al - L)))             # (B, Cin_p, L_al)

    # --- tiny per-tile halo side array (B, nLt, Cin_p, max_k-1): [left | right],
    # gathered from xb with zero fill at the sequence edges.
    ti = jnp.arange(nLt)[:, None]
    jj = jnp.arange(halo_w)[None, :]
    src = jnp.where(jj < halo_left,
                    ti * L_t - halo_left + jj,
                    (ti + 1) * L_t + (jj - halo_left))                  # (nLt, halo_w)
    valid = (src >= 0) & (src < L_al)
    halos = jnp.take(xb, jnp.clip(src, 0, L_al - 1).reshape(-1), axis=2)
    halos = halos.reshape(B, Cin_p, nLt, halo_w)
    halos = jnp.where(valid[None, None], halos, 0).astype(jnp.bfloat16)
    halos = jnp.transpose(halos, (0, 2, 1, 3))                          # (B,nLt,Cin_p,halo_w)

    kernel = make_concat_block_kernel(Cin_p, Cout, L_t, max_k, halo_left, n_br)

    # VMEM budget: im2col scratch + double-buffered in/out tiles + weights.
    vmem_est = (max_k * Cin_p * L_t * 2
                + 2 * Cin_p * L_t * 2
                + 2 * Cin_p * halo_w * 2
                + 2 * Cout * L_t * 4
                + 2 * (w_all.size * 2 + (n_br + 1) * Cout * 4
                       + Cout * n_br * Cout * 2 + Cout * 4))
    vmem_limit = int(min(max(32 << 20, 2 * vmem_est + (4 << 20)), 48 << 20))

    out = pl.pallas_call(
        kernel,
        out_shape=jax.ShapeDtypeStruct((B, Cout, L_al), jnp.float32),
        grid=(B, nLt),
        in_specs=[
            pl.BlockSpec((None, Cin_p, L_t), lambda b, i: (b, 0, i)),
            pl.BlockSpec((None, None, Cin_p, halo_w), lambda b, i: (b, i, 0, 0)),
            pl.BlockSpec(((n_br + 1) * Cout, max_k * Cin_p), lambda b, i: (0, 0)),
            pl.BlockSpec(((n_br + 1) * Cout, 1), lambda b, i: (0, 0)),
            pl.BlockSpec((Cout, n_br * Cout), lambda b, i: (0, 0)),
            pl.BlockSpec((Cout, 1), lambda b, i: (0, 0)),
        ],
        out_specs=pl.BlockSpec((None, Cout, L_t), lambda b, i: (b, 0, i)),
        scratch_shapes=[pltpu.VMEM((max_k * Cin_p, L_t), jnp.bfloat16)],
        compiler_params=pltpu.CompilerParams(
            dimension_semantics=("parallel", "parallel"),
            vmem_limit_bytes=vmem_limit),
    )(xb, halos, w_all, b_all, w6_br, b6f)

    # TODO(synk): emit bf16 output if the downstream consumer allows it.
    return out[:, :, :L] if L_al != L else out


def init_params(key, in_channels, out_channels, kernel_size):
    """Deterministic parameter init mimicking the module's __init__ shapes."""
    ks = [kernel_size, kernel_size * 2, kernel_size // 2, kernel_size // 4,
          kernel_size * 4]
    c_cat = out_channels * 5 + in_channels
    params = {}

    def branch(key, cin, cout, k):
        kw, kb, kg, kbe, km, kv = jax.random.split(key, 6)
        bound = 1.0 / jnp.sqrt(float(cin * k))
        return {
            "w": jax.random.uniform(kw, (cout, cin, k), jnp.float32, -bound, bound),
            "b": jax.random.uniform(kb, (cout,), jnp.float32, -bound, bound),
            "gamma": jax.random.uniform(kg, (cout,), jnp.float32, 0.5, 1.5),
            "beta": 0.1 * jax.random.normal(kbe, (cout,), jnp.float32),
            "mean": 0.1 * jax.random.normal(km, (cout,), jnp.float32),
            "var": jax.random.uniform(kv, (cout,), jnp.float32, 0.5, 1.5),
        }

    keys = jax.random.split(key, 6)
    for i in range(1, 6):
        params[f"c{i}"] = branch(keys[i - 1], in_channels, out_channels, ks[i - 1])
    params["c6"] = branch(keys[5], c_cat, out_channels, 1)
    return params


def reference_forward(x_ncw, params):
    """Pure-JAX f32 reference matching the PyTorch module (inference-mode BN)."""
    def conv_same(x, w, b):
        K = w.shape[-1]
        pad_w = K - 1                       # stride=1, dilation=1
        left, right = pad_w // 2, pad_w - pad_w // 2
        xp = jnp.pad(x, ((0, 0), (0, 0), (left, right)))
        y = jax.lax.conv_general_dilated(
            xp, w, window_strides=(1,), padding="VALID",
            dimension_numbers=("NCH", "OIH", "NCH"))
        return y + b[None, :, None]

    def bn(y, p):
        return ((y - p["mean"][None, :, None])
                / jnp.sqrt(p["var"][None, :, None] + BN_EPS)
                * p["gamma"][None, :, None] + p["beta"][None, :, None])

    outs = []
    for i in range(1, 6):
        p = params[f"c{i}"]
        y = bn(conv_same(x_ncw, p["w"], p["b"]), p)
        outs.append(y * jax.nn.sigmoid(y))
    cat = jnp.concatenate(outs + [x_ncw], axis=1)
    p6 = params["c6"]
    y = bn(conv_same(cat, p6["w"], p6["b"]), p6)
    return y * jax.nn.sigmoid(y)


if __name__ == "__main__":
    B, Cin, Cout, L, K = 2, 4, 8, 16, 4

    key = jax.random.PRNGKey(0)
    kx, kp = jax.random.split(key)
    x = jax.random.normal(kx, (B, Cin, L), jnp.float32)   # PyTorch NCW input
    params = init_params(kp, Cin, Cout, K)

    out = jax.block_until_ready(concat_block_conv5(x, params))
    ref = jax.block_until_ready(reference_forward(x, params))

    assert out.shape == (B, Cout, L), out.shape
    err = float(jnp.max(jnp.abs(out - ref)))
    # bf16 matmul inputs with f32 accumulation -> loosened vs strict f32.
    assert err < 3e-2, err

    print("KERNEL_OK")
</pallas_src>

<mosaic_0001>
module attributes {stable_mosaic.version = 11 : i64} {
  func.func @kernel(%arg0: i32, %arg1: i32, %arg2: memref<1x16x16xbf16, #tpu.memory_space<vmem>>, %arg3: memref<1x1x16x15xbf16, #tpu.memory_space<vmem>>, %arg4: memref<48x256xbf16, #tpu.memory_space<vmem>>, %arg5: memref<48x1xf32, #tpu.memory_space<vmem>>, %arg6: memref<8x40xbf16, #tpu.memory_space<vmem>>, %arg7: memref<8x1xf32, #tpu.memory_space<vmem>>, %arg8: memref<1x8x16xf32, #tpu.memory_space<vmem>>, %arg9: memref<256x16xbf16, #tpu.memory_space<vmem>>) attributes {dimension_semantics = [#tpu.dimension_semantics<parallel>, #tpu.dimension_semantics<parallel>], iteration_bounds = array<i64: 2, 1>, scalar_prefetch = 0 : i64, scratch_operands = 1 : i64, tpu.core_type = #tpu.core_type<tc>, window_params = [{transform_indices = @transform_0, window_bounds = array<i64: 1, 16, 16>}, {transform_indices = @transform_1, window_bounds = array<i64: 1, 1, 16, 15>}, {pipeline_mode = #tpu.pipeline_mode<synchronous>, transform_indices = @transform_2, window_bounds = array<i64: 48, 256>}, {pipeline_mode = #tpu.pipeline_mode<synchronous>, transform_indices = @transform_3, window_bounds = array<i64: 48, 1>}, {pipeline_mode = #tpu.pipeline_mode<synchronous>, transform_indices = @transform_4, window_bounds = array<i64: 8, 40>}, {pipeline_mode = #tpu.pipeline_mode<synchronous>, transform_indices = @transform_5, window_bounds = array<i64: 8, 1>}, {transform_indices = @transform_6, window_bounds = array<i64: 1, 8, 16>}]} {
    %c0 = arith.constant 0 : index
    %c0_0 = arith.constant 0 : index
    %c0_1 = arith.constant 0 : index
    %c0_2 = arith.constant 0 : index
    %0 = vector.load %arg3[%c0, %c0_0, %c0_1, %c0_2] : memref<1x1x16x15xbf16, #tpu.memory_space<vmem>>, vector<1x1x16x7xbf16>
    %1 = vector.shape_cast %0 : vector<1x1x16x7xbf16> to vector<16x7xbf16>
    %c0_3 = arith.constant 0 : index
    %c0_4 = arith.constant 0 : index
    %2 = vector.load %arg9[%c0_3, %c0_4] : memref<256x16xbf16, #tpu.memory_space<vmem>>, vector<16x7xbf16>
    tpu.vector_store %arg9[%c0_3, %c0_4], %1 {strides = array<i32>} : memref<256x16xbf16, #tpu.memory_space<vmem>>, vector<16x7xbf16>,
    %c0_5 = arith.constant 0 : index
    %c0_6 = arith.constant 0 : index
    %c0_7 = arith.constant 0 : index
    %3 = vector.load %arg2[%c0_5, %c0_6, %c0_7] : memref<1x16x16xbf16, #tpu.memory_space<vmem>>, vector<1x16x9xbf16>
    %4 = vector.shape_cast %3 : vector<1x16x9xbf16> to vector<16x9xbf16>
    %c0_8 = arith.constant 0 : index
    %c7 = arith.constant 7 : index
    %5 = vector.load %arg9[%c0_8, %c7] : memref<256x16xbf16, #tpu.memory_space<vmem>>, vector<16x9xbf16>
    tpu.vector_store %arg9[%c0_8, %c7], %4 {strides = array<i32>} : memref<256x16xbf16, #tpu.memory_space<vmem>>, vector<16x9xbf16>,
    %c0_9 = arith.constant 0 : index
    %c0_10 = arith.constant 0 : index
    %c0_11 = arith.constant 0 : index
    %c1 = arith.constant 1 : index
    %6 = vector.load %arg3[%c0_9, %c0_10, %c0_11, %c1] : memref<1x1x16x15xbf16, #tpu.memory_space<vmem>>, vector<1x1x16x6xbf16>
    %7 = vector.shape_cast %6 : vector<1x1x16x6xbf16> to vector<16x6xbf16>
    %c16 = arith.constant 16 : index
    %c0_12 = arith.constant 0 : index
    %8 = vector.load %arg9[%c16, %c0_12] : memref<256x16xbf16, #tpu.memory_space<vmem>>, vector<16x6xbf16>
    tpu.vector_store %arg9[%c16, %c0_12], %7 {strides = array<i32>} : memref<256x16xbf16, #tpu.memory_space<vmem>>, vector<16x6xbf16>,
    %c0_13 = arith.constant 0 : index
    %c0_14 = arith.constant 0 : index
    %c0_15 = arith.constant 0 : index
    %9 = vector.load %arg2[%c0_13, %c0_14, %c0_15] : memref<1x16x16xbf16, #tpu.memory_space<vmem>>, vector<1x16x10xbf16>
    %10 = vector.shape_cast %9 : vector<1x16x10xbf16> to vector<16x10xbf16>
    %c16_16 = arith.constant 16 : index
    %c6 = arith.constant 6 : index
    %11 = vector.load %arg9[%c16_16, %c6] : memref<256x16xbf16, #tpu.memory_space<vmem>>, vector<16x10xbf16>
    tpu.vector_store %arg9[%c16_16, %c6], %10 {strides = array<i32>} : memref<256x16xbf16, #tpu.memory_space<vmem>>, vector<16x10xbf16>,
    %c0_17 = arith.constant 0 : index
    %c0_18 = arith.constant 0 : index
    %c0_19 = arith.constant 0 : index
    %c2 = arith.constant 2 : index
    %12 = vector.load %arg3[%c0_17, %c0_18, %c0_19, %c2] : memref<1x1x16x15xbf16, #tpu.memory_space<vmem>>, vector<1x1x16x5xbf16>
    %13 = vector.shape_cast %12 : vector<1x1x16x5xbf16> to vector<16x5xbf16>
    %c32 = arith.constant 32 : index
    %c0_20 = arith.constant 0 : index
    %14 = vector.load %arg9[%c32, %c0_20] : memref<256x16xbf16, #tpu.memory_space<vmem>>, vector<16x5xbf16>
    tpu.vector_store %arg9[%c32, %c0_20], %13 {strides = array<i32>} : memref<256x16xbf16, #tpu.memory_space<vmem>>, vector<16x5xbf16>,
    %c0_21 = arith.constant 0 : index
    %c0_22 = arith.constant 0 : index
    %c0_23 = arith.constant 0 : index
    %15 = vector.load %arg2[%c0_21, %c0_22, %c0_23] : memref<1x16x16xbf16, #tpu.memory_space<vmem>>, vector<1x16x11xbf16>
    %16 = vector.shape_cast %15 : vector<1x16x11xbf16> to vector<16x11xbf16>
    %c32_24 = arith.constant 32 : index
    %c5 = arith.constant 5 : index
    %17 = vector.load %arg9[%c32_24, %c5] : memref<256x16xbf16, #tpu.memory_space<vmem>>, vector<16x11xbf16>
    tpu.vector_store %arg9[%c32_24, %c5], %16 {strides = array<i32>} : memref<256x16xbf16, #tpu.memory_space<vmem>>, vector<16x11xbf16>,
    %c0_25 = arith.constant 0 : index
    %c0_26 = arith.constant 0 : index
    %c0_27 = arith.constant 0 : index
    %c3 = arith.constant 3 : index
    %18 = vector.load %arg3[%c0_25, %c0_26, %c0_27, %c3] : memref<1x1x16x15xbf16, #tpu.memory_space<vmem>>, vector<1x1x16x4xbf16>
    %19 = vector.shape_cast %18 : vector<1x1x16x4xbf16> to vector<16x4xbf16>
    %c48 = arith.constant 48 : index
    %c0_28 = arith.constant 0 : index
    %20 = vector.load %arg9[%c48, %c0_28] : memref<256x16xbf16, #tpu.memory_space<vmem>>, vector<16x4xbf16>
    tpu.vector_store %arg9[%c48, %c0_28], %19 {strides = array<i32>} : memref<256x16xbf16, #tpu.memory_space<vmem>>, vector<16x4xbf16>,
    %c0_29 = arith.constant 0 : index
    %c0_30 = arith.constant 0 : index
    %c0_31 = arith.constant 0 : index
    %21 = vector.load %arg2[%c0_29, %c0_30, %c0_31] : memref<1x16x16xbf16, #tpu.memory_space<vmem>>, vector<1x16x12xbf16>
    %22 = vector.shape_cast %21 : vector<1x16x12xbf16> to vector<16x12xbf16>
    %c48_32 = arith.constant 48 : index
    %c4 = arith.constant 4 : index
    %23 = vector.load %arg9[%c48_32, %c4] : memref<256x16xbf16, #tpu.memory_space<vmem>>, vector<16x12xbf16>
    tpu.vector_store %arg9[%c48_32, %c4], %22 {strides = array<i32>} : memref<256x16xbf16, #tpu.memory_space<vmem>>, vector<16x12xbf16>,
    %c0_33 = arith.constant 0 : index
    %c0_34 = arith.constant 0 : index
    %c0_35 = arith.constant 0 : index
    %c4_36 = arith.constant 4 : index
    %24 = vector.load %arg3[%c0_33, %c0_34, %c0_35, %c4_36] : memref<1x1x16x15xbf16, #tpu.memory_space<vmem>>, vector<1x1x16x3xbf16>
    %25 = vector.shape_cast %24 : vector<1x1x16x3xbf16> to vector<16x3xbf16>
    %c64 = arith.constant 64 : index
    %c0_37 = arith.constant 0 : index
    %26 = vector.load %arg9[%c64, %c0_37] : memref<256x16xbf16, #tpu.memory_space<vmem>>, vector<16x3xbf16>
    tpu.vector_store %arg9[%c64, %c0_37], %25 {strides = array<i32>} : memref<256x16xbf16, #tpu.memory_space<vmem>>, vector<16x3xbf16>,
    %c0_38 = arith.constant 0 : index
    %c0_39 = arith.constant 0 : index
    %c0_40 = arith.constant 0 : index
    %27 = vector.load %arg2[%c0_38, %c0_39, %c0_40] : memref<1x16x16xbf16, #tpu.memory_space<vmem>>, vector<1x16x13xbf16>
    %28 = vector.shape_cast %27 : vector<1x16x13xbf16> to vector<16x13xbf16>
    %c64_41 = arith.constant 64 : index
    %c3_42 = arith.constant 3 : index
    %29 = vector.load %arg9[%c64_41, %c3_42] : memref<256x16xbf16, #tpu.memory_space<vmem>>, vector<16x13xbf16>
    tpu.vector_store %arg9[%c64_41, %c3_42], %28 {strides = array<i32>} : memref<256x16xbf16, #tpu.memory_space<vmem>>, vector<16x13xbf16>,
    %c0_43 = arith.constant 0 : index
    %c0_44 = arith.constant 0 : index
    %c0_45 = arith.constant 0 : index
    %c5_46 = arith.constant 5 : index
    %30 = vector.load %arg3[%c0_43, %c0_44, %c0_45, %c5_46] : memref<1x1x16x15xbf16, #tpu.memory_space<vmem>>, vector<1x1x16x2xbf16>
    %31 = vector.shape_cast %30 : vector<1x1x16x2xbf16> to vector<16x2xbf16>
    %c80 = arith.constant 80 : index
    %c0_47 = arith.constant 0 : index
    %32 = vector.load %arg9[%c80, %c0_47] : memref<256x16xbf16, #tpu.memory_space<vmem>>, vector<16x2xbf16>
    tpu.vector_store %arg9[%c80, %c0_47], %31 {strides = array<i32>} : memref<256x16xbf16, #tpu.memory_space<vmem>>, vector<16x2xbf16>,
    %c0_48 = arith.constant 0 : index
    %c0_49 = arith.constant 0 : index
    %c0_50 = arith.constant 0 : index
    %33 = vector.load %arg2[%c0_48, %c0_49, %c0_50] : memref<1x16x16xbf16, #tpu.memory_space<vmem>>, vector<1x16x14xbf16>
    %34 = vector.shape_cast %33 : vector<1x16x14xbf16> to vector<16x14xbf16>
    %c80_51 = arith.constant 80 : index
    %c2_52 = arith.constant 2 : index
    %35 = vector.load %arg9[%c80_51, %c2_52] : memref<256x16xbf16, #tpu.memory_space<vmem>>, vector<16x14xbf16>
    tpu.vector_store %arg9[%c80_51, %c2_52], %34 {strides = array<i32>} : memref<256x16xbf16, #tpu.memory_space<vmem>>, vector<16x14xbf16>,
    %c0_53 = arith.constant 0 : index
    %c0_54 = arith.constant 0 : index
    %c0_55 = arith.constant 0 : index
    %c6_56 = arith.constant 6 : index
    %36 = vector.load %arg3[%c0_53, %c0_54, %c0_55, %c6_56] : memref<1x1x16x15xbf16, #tpu.memory_space<vmem>>, vector<1x1x16x1xbf16>
    %37 = vector.shape_cast %36 : vector<1x1x16x1xbf16> to vector<16x1xbf16>
    %c96 = arith.constant 96 : index
    %c0_57 = arith.constant 0 : index
    %38 = vector.load %arg9[%c96, %c0_57] : memref<256x16xbf16, #tpu.memory_space<vmem>>, vector<16x1xbf16>
    tpu.vector_store %arg9[%c96, %c0_57], %37 {strides = array<i32>} : memref<256x16xbf16, #tpu.memory_space<vmem>>, vector<16x1xbf16>,
    %c0_58 = arith.constant 0 : index
    %c0_59 = arith.constant 0 : index
    %c0_60 = arith.constant 0 : index
    %39 = vector.load %arg2[%c0_58, %c0_59, %c0_60] : memref<1x16x16xbf16, #tpu.memory_space<vmem>>, vector<1x16x15xbf16>
    %40 = vector.shape_cast %39 : vector<1x16x15xbf16> to vector<16x15xbf16>
    %c96_61 = arith.constant 96 : index
    %c1_62 = arith.constant 1 : index
    %41 = vector.load %arg9[%c96_61, %c1_62] : memref<256x16xbf16, #tpu.memory_space<vmem>>, vector<16x15xbf16>
    tpu.vector_store %arg9[%c96_61, %c1_62], %40 {strides = array<i32>} : memref<256x16xbf16, #tpu.memory_space<vmem>>, vector<16x15xbf16>,
    %c0_63 = arith.constant 0 : index
    %c0_64 = arith.constant 0 : index
    %c0_65 = arith.constant 0 : index
    %42 = vector.load %arg2[%c0_63, %c0_64, %c0_65] : memref<1x16x16xbf16, #tpu.memory_space<vmem>>, vector<1x16x16xbf16>
    %43 = vector.shape_cast %42 : vector<1x16x16xbf16> to vector<16x16xbf16>
    %c112 = arith.constant 112 : index
    %c0_66 = arith.constant 0 : index
    %44 = vector.load %arg9[%c112, %c0_66] : memref<256x16xbf16, #tpu.memory_space<vmem>>, vector<16x16xbf16>
    tpu.vector_store %arg9[%c112, %c0_66], %43 {strides = array<i32>} : memref<256x16xbf16, #tpu.memory_space<vmem>>, vector<16x16xbf16>,
    %c0_67 = arith.constant 0 : index
    %c0_68 = arith.constant 0 : index
    %c1_69 = arith.constant 1 : index
    %45 = vector.load %arg2[%c0_67, %c0_68, %c1_69] : memref<1x16x16xbf16, #tpu.memory_space<vmem>>, vector<1x16x15xbf16>
    %46 = vector.shape_cast %45 : vector<1x16x15xbf16> to vector<16x15xbf16>
    %c128 = arith.constant 128 : index
    %c0_70 = arith.constant 0 : index
    %47 = vector.load %arg9[%c128, %c0_70] : memref<256x16xbf16, #tpu.memory_space<vmem>>, vector<16x15xbf16>
    tpu.vector_store %arg9[%c128, %c0_70], %46 {strides = array<i32>} : memref<256x16xbf16, #tpu.memory_space<vmem>>, vector<16x15xbf16>,
    %c0_71 = arith.constant 0 : index
    %c0_72 = arith.constant 0 : index
    %c0_73 = arith.constant 0 : index
    %c7_74 = arith.constant 7 : index
    %48 = vector.load %arg3[%c0_71, %c0_72, %c0_73, %c7_74] : memref<1x1x16x15xbf16, #tpu.memory_space<vmem>>, vector<1x1x16x1xbf16>
    %49 = vector.shape_cast %48 : vector<1x1x16x1xbf16> to vector<16x1xbf16>
    %c128_75 = arith.constant 128 : index
    %c15 = arith.constant 15 : index
    %50 = vector.load %arg9[%c128_75, %c15] : memref<256x16xbf16, #tpu.memory_space<vmem>>, vector<16x1xbf16>
    tpu.vector_store %arg9[%c128_75, %c15], %49 {strides = array<i32>} : memref<256x16xbf16, #tpu.memory_space<vmem>>, vector<16x1xbf16>,
    %c0_76 = arith.constant 0 : index
    %c0_77 = arith.constant 0 : index
    %c2_78 = arith.constant 2 : index
    %51 = vector.load %arg2[%c0_76, %c0_77, %c2_78] : memref<1x16x16xbf16, #tpu.memory_space<vmem>>, vector<1x16x14xbf16>
    %52 = vector.shape_cast %51 : vector<1x16x14xbf16> to vector<16x14xbf16>
    %c144 = arith.constant 144 : index
    %c0_79 = arith.constant 0 : index
    %53 = vector.load %arg9[%c144, %c0_79] : memref<256x16xbf16, #tpu.memory_space<vmem>>, vector<16x14xbf16>
    tpu.vector_store %arg9[%c144, %c0_79], %52 {strides = array<i32>} : memref<256x16xbf16, #tpu.memory_space<vmem>>, vector<16x14xbf16>,
    %c0_80 = arith.constant 0 : index
    %c0_81 = arith.constant 0 : index
    %c0_82 = arith.constant 0 : index
    %c7_83 = arith.constant 7 : index
    %54 = vector.load %arg3[%c0_80, %c0_81, %c0_82, %c7_83] : memref<1x1x16x15xbf16, #tpu.memory_space<vmem>>, vector<1x1x16x2xbf16>
    %55 = vector.shape_cast %54 : vector<1x1x16x2xbf16> to vector<16x2xbf16>
    %c144_84 = arith.constant 144 : index
    %c14 = arith.constant 14 : index
    %56 = vector.load %arg9[%c144_84, %c14] : memref<256x16xbf16, #tpu.memory_space<vmem>>, vector<16x2xbf16>
    tpu.vector_store %arg9[%c144_84, %c14], %55 {strides = array<i32>} : memref<256x16xbf16, #tpu.memory_space<vmem>>, vector<16x2xbf16>,
    %c0_85 = arith.constant 0 : index
    %c0_86 = arith.constant 0 : index
    %c3_87 = arith.constant 3 : index
    %57 = vector.load %arg2[%c0_85, %c0_86, %c3_87] : memref<1x16x16xbf16, #tpu.memory_space<vmem>>, vector<1x16x13xbf16>
    %58 = vector.shape_cast %57 : vector<1x16x13xbf16> to vector<16x13xbf16>
    %c160 = arith.constant 160 : index
    %c0_88 = arith.constant 0 : index
    %59 = vector.load %arg9[%c160, %c0_88] : memref<256x16xbf16, #tpu.memory_space<vmem>>, vector<16x13xbf16>
    tpu.vector_store %arg9[%c160, %c0_88], %58 {strides = array<i32>} : memref<256x16xbf16, #tpu.memory_space<vmem>>, vector<16x13xbf16>,
    %c0_89 = arith.constant 0 : index
    %c0_90 = arith.constant 0 : index
    %c0_91 = arith.constant 0 : index
    %c7_92 = arith.constant 7 : index
    %60 = vector.load %arg3[%c0_89, %c0_90, %c0_91, %c7_92] : memref<1x1x16x15xbf16, #tpu.memory_space<vmem>>, vector<1x1x16x3xbf16>
    %61 = vector.shape_cast %60 : vector<1x1x16x3xbf16> to vector<16x3xbf16>
    %c160_93 = arith.constant 160 : index
    %c13 = arith.constant 13 : index
    %62 = vector.load %arg9[%c160_93, %c13] : memref<256x16xbf16, #tpu.memory_space<vmem>>, vector<16x3xbf16>
    tpu.vector_store %arg9[%c160_93, %c13], %61 {strides = array<i32>} : memref<256x16xbf16, #tpu.memory_space<vmem>>, vector<16x3xbf16>,
    %c0_94 = arith.constant 0 : index
    %c0_95 = arith.constant 0 : index
    %c4_96 = arith.constant 4 : index
    %63 = vector.load %arg2[%c0_94, %c0_95, %c4_96] : memref<1x16x16xbf16, #tpu.memory_space<vmem>>, vector<1x16x12xbf16>
    %64 = vector.shape_cast %63 : vector<1x16x12xbf16> to vector<16x12xbf16>
    %c176 = arith.constant 176 : index
    %c0_97 = arith.constant 0 : index
    %65 = vector.load %arg9[%c176, %c0_97] : memref<256x16xbf16, #tpu.memory_space<vmem>>, vector<16x12xbf16>
    tpu.vector_store %arg9[%c176, %c0_97], %64 {strides = array<i32>} : memref<256x16xbf16, #tpu.memory_space<vmem>>, vector<16x12xbf16>,
    %c0_98 = arith.constant 0 : index
    %c0_99 = arith.constant 0 : index
    %c0_100 = arith.constant 0 : index
    %c7_101 = arith.constant 7 : index
    %66 = vector.load %arg3[%c0_98, %c0_99, %c0_100, %c7_101] : memref<1x1x16x15xbf16, #tpu.memory_space<vmem>>, vector<1x1x16x4xbf16>
    %67 = vector.shape_cast %66 : vector<1x1x16x4xbf16> to vector<16x4xbf16>
    %c176_102 = arith.constant 176 : index
    %c12 = arith.constant 12 : index
    %68 = vector.load %arg9[%c176_102, %c12] : memref<256x16xbf16, #tpu.memory_space<vmem>>, vector<16x4xbf16>
    tpu.vector_store %arg9[%c176_102, %c12], %67 {strides = array<i32>} : memref<256x16xbf16, #tpu.memory_space<vmem>>, vector<16x4xbf16>,
    %c0_103 = arith.constant 0 : index
    %c0_104 = arith.constant 0 : index
    %c5_105 = arith.constant 5 : index
    %69 = vector.load %arg2[%c0_103, %c0_104, %c5_105] : memref<1x16x16xbf16, #tpu.memory_space<vmem>>, vector<1x16x11xbf16>
    %70 = vector.shape_cast %69 : vector<1x16x11xbf16> to vector<16x11xbf16>
    %c192 = arith.constant 192 : index
    %c0_106 = arith.constant 0 : index
    %71 = vector.load %arg9[%c192, %c0_106] : memref<256x16xbf16, #tpu.memory_space<vmem>>, vector<16x11xbf16>
    tpu.vector_store %arg9[%c192, %c0_106], %70 {strides = array<i32>} : memref<256x16xbf16, #tpu.memory_space<vmem>>, vector<16x11xbf16>,
    %c0_107 = arith.constant 0 : index
    %c0_108 = arith.constant 0 : index
    %c0_109 = arith.constant 0 : index
    %c7_110 = arith.constant 7 : index
    %72 = vector.load %arg3[%c0_107, %c0_108, %c0_109, %c7_110] : memref<1x1x16x15xbf16, #tpu.memory_space<vmem>>, vector<1x1x16x5xbf16>
    %73 = vector.shape_cast %72 : vector<1x1x16x5xbf16> to vector<16x5xbf16>
    %c192_111 = arith.constant 192 : index
    %c11 = arith.constant 11 : index
    %74 = vector.load %arg9[%c192_111, %c11] : memref<256x16xbf16, #tpu.memory_space<vmem>>, vector<16x5xbf16>
    tpu.vector_store %arg9[%c192_111, %c11], %73 {strides = array<i32>} : memref<256x16xbf16, #tpu.memory_space<vmem>>, vector<16x5xbf16>,
    %c0_112 = arith.constant 0 : index
    %c0_113 = arith.constant 0 : index
    %c6_114 = arith.constant 6 : index
    %75 = vector.load %arg2[%c0_112, %c0_113, %c6_114] : memref<1x16x16xbf16, #tpu.memory_space<vmem>>, vector<1x16x10xbf16>
    %76 = vector.shape_cast %75 : vector<1x16x10xbf16> to vector<16x10xbf16>
    %c208 = arith.constant 208 : index
    %c0_115 = arith.constant 0 : index
    %77 = vector.load %arg9[%c208, %c0_115] : memref<256x16xbf16, #tpu.memory_space<vmem>>, vector<16x10xbf16>
    tpu.vector_store %arg9[%c208, %c0_115], %76 {strides = array<i32>} : memref<256x16xbf16, #tpu.memory_space<vmem>>, vector<16x10xbf16>,
    %c0_116 = arith.constant 0 : index
    %c0_117 = arith.constant 0 : index
    %c0_118 = arith.constant 0 : index
    %c7_119 = arith.constant 7 : index
    %78 = vector.load %arg3[%c0_116, %c0_117, %c0_118, %c7_119] : memref<1x1x16x15xbf16, #tpu.memory_space<vmem>>, vector<1x1x16x6xbf16>
    %79 = vector.shape_cast %78 : vector<1x1x16x6xbf16> to vector<16x6xbf16>
    %c208_120 = arith.constant 208 : index
    %c10 = arith.constant 10 : index
    %80 = vector.load %arg9[%c208_120, %c10] : memref<256x16xbf16, #tpu.memory_space<vmem>>, vector<16x6xbf16>
    tpu.vector_store %arg9[%c208_120, %c10], %79 {strides = array<i32>} : memref<256x16xbf16, #tpu.memory_space<vmem>>, vector<16x6xbf16>,
    %c0_121 = arith.constant 0 : index
    %c0_122 = arith.constant 0 : index
    %c7_123 = arith.constant 7 : index
    %81 = vector.load %arg2[%c0_121, %c0_122, %c7_123] : memref<1x16x16xbf16, #tpu.memory_space<vmem>>, vector<1x16x9xbf16>
    %82 = vector.shape_cast %81 : vector<1x16x9xbf16> to vector<16x9xbf16>
    %c224 = arith.constant 224 : index
    %c0_124 = arith.constant 0 : index
    %83 = vector.load %arg9[%c224, %c0_124] : memref<256x16xbf16, #tpu.memory_space<vmem>>, vector<16x9xbf16>
    tpu.vector_store %arg9[%c224, %c0_124], %82 {strides = array<i32>} : memref<256x16xbf16, #tpu.memory_space<vmem>>, vector<16x9xbf16>,
    %c0_125 = arith.constant 0 : index
    %c0_126 = arith.constant 0 : index
    %c0_127 = arith.constant 0 : index
    %c7_128 = arith.constant 7 : index
    %84 = vector.load %arg3[%c0_125, %c0_126, %c0_127, %c7_128] : memref<1x1x16x15xbf16, #tpu.memory_space<vmem>>, vector<1x1x16x7xbf16>
    %85 = vector.shape_cast %84 : vector<1x1x16x7xbf16> to vector<16x7xbf16>
    %c224_129 = arith.constant 224 : index
    %c9 = arith.constant 9 : index
    %86 = vector.load %arg9[%c224_129, %c9] : memref<256x16xbf16, #tpu.memory_space<vmem>>, vector<16x7xbf16>
    tpu.vector_store %arg9[%c224_129, %c9], %85 {strides = array<i32>} : memref<256x16xbf16, #tpu.memory_space<vmem>>, vector<16x7xbf16>,
    %c0_130 = arith.constant 0 : index
    %c0_131 = arith.constant 0 : index
    %c8 = arith.constant 8 : index
    %87 = vector.load %arg2[%c0_130, %c0_131, %c8] : memref<1x16x16xbf16, #tpu.memory_space<vmem>>, vector<1x16x8xbf16>
    %88 = vector.shape_cast %87 : vector<1x16x8xbf16> to vector<16x8xbf16>
    %c240 = arith.constant 240 : index
    %c0_132 = arith.constant 0 : index
    %89 = vector.load %arg9[%c240, %c0_132] : memref<256x16xbf16, #tpu.memory_space<vmem>>, vector<16x8xbf16>
    tpu.vector_store %arg9[%c240, %c0_132], %88 {strides = array<i32>} : memref<256x16xbf16, #tpu.memory_space<vmem>>, vector<16x8xbf16>,
    %c0_133 = arith.constant 0 : index
    %c0_134 = arith.constant 0 : index
    %c0_135 = arith.constant 0 : index
    %c7_136 = arith.constant 7 : index
    %90 = vector.load %arg3[%c0_133, %c0_134, %c0_135, %c7_136] : memref<1x1x16x15xbf16, #tpu.memory_space<vmem>>, vector<1x1x16x8xbf16>
    %91 = vector.shape_cast %90 : vector<1x1x16x8xbf16> to vector<16x8xbf16>
    %c240_137 = arith.constant 240 : index
    %c8_138 = arith.constant 8 : index
    %92 = vector.load %arg9[%c240_137, %c8_138] : memref<256x16xbf16, #tpu.memory_space<vmem>>, vector<16x8xbf16>
    tpu.vector_store %arg9[%c240_137, %c8_138], %91 {strides = array<i32>} : memref<256x16xbf16, #tpu.memory_space<vmem>>, vector<16x8xbf16>,
    %c0_139 = arith.constant 0 : index
    %c0_140 = arith.constant 0 : index
    %93 = vector.load %arg9[%c0_139, %c0_140] : memref<256x16xbf16, #tpu.memory_space<vmem>>, vector<256x16xbf16>
    %c0_141 = arith.constant 0 : index
    %c0_142 = arith.constant 0 : index
    %94 = vector.load %arg4[%c0_141, %c0_142] : memref<48x256xbf16, #tpu.memory_space<vmem>>, vector<48x256xbf16>
    %cst = arith.constant dense<0.000000e+00> : vector<48x16xf32>
    %95 = tpu.matmul %94, %93, %cst {dimension_numbers = #tpu.dot_dimension_numbers<[1], [0], [0], [1], [0, 0, 1, 1], [], []>} : vector<48x256xbf16>, vector<256x16xbf16>, vector<48x16xf32> -> vector<48x16xf32>
    %c0_143 = arith.constant 0 : index
    %c0_144 = arith.constant 0 : index
    %96 = vector.load %arg5[%c0_143, %c0_144] : memref<48x1xf32, #tpu.memory_space<vmem>>, vector<48x1xf32>
    %97 = vector.broadcast %96 : vector<48x1xf32> to vector<48x16xf32>
    %98 = arith.addf %95, %97 : vector<48x16xf32>
    %99 = vector.extract_strided_slice %98 {offsets = [0, 0], sizes = [40, 16], strides = [1, 1]} : vector<48x16xf32> to vector<40x16xf32>
    %100 = arith.negf %99 : vector<40x16xf32>
    %101 = math.exp %100 : vector<40x16xf32>
    %cst_145 = arith.constant 1.000000e+00 : f32
    %102 = vector.broadcast %cst_145 : f32 to vector<40x16xf32>
    %103 = arith.addf %102, %101 : vector<40x16xf32>
    %104 = arith.divf %102, %103 : vector<40x16xf32>
    %105 = arith.mulf %99, %104 : vector<40x16xf32>
    %106 = vector.extract_strided_slice %98 {offsets = [40, 0], sizes = [8, 16], strides = [1, 1]} : vector<48x16xf32> to vector<8x16xf32>
    %c0_146 = arith.constant 0 : index
    %c0_147 = arith.constant 0 : index
    %107 = vector.load %arg6[%c0_146, %c0_147] : memref<8x40xbf16, #tpu.memory_space<vmem>>, vector<8x40xbf16>
    %108 = arith.truncf %105 : vector<40x16xf32> to vector<40x16xbf16>
    %cst_148 = arith.constant dense<0.000000e+00> : vector<8x16xf32>
    %109 = tpu.matmul %107, %108, %cst_148 {dimension_numbers = #tpu.dot_dimension_numbers<[1], [0], [0], [1], [0, 0, 1, 1], [], []>} : vector<8x40xbf16>, vector<40x16xbf16>, vector<8x16xf32> -> vector<8x16xf32>
    %110 = arith.addf %109, %106 : vector<8x16xf32>
    %c0_149 = arith.constant 0 : index
    %c0_150 = arith.constant 0 : index
    %111 = vector.load %arg7[%c0_149, %c0_150] : memref<8x1xf32, #tpu.memory_space<vmem>>, vector<8x1xf32>
    %112 = vector.broadcast %111 : vector<8x1xf32> to vector<8x16xf32>
    %113 = arith.addf %110, %112 : vector<8x16xf32>
    %114 = arith.negf %113 : vector<8x16xf32>
    %115 = math.exp %114 : vector<8x16xf32>
    %cst_151 = arith.constant 1.000000e+00 : f32
    %116 = vector.broadcast %cst_151 : f32 to vector<8x16xf32>
    %117 = arith.addf %116, %115 : vector<8x16xf32>
    %118 = arith.divf %116, %117 : vector<8x16xf32>
    %119 = arith.mulf %113, %118 : vector<8x16xf32>
    %c0_152 = arith.constant 0 : index
    %c0_153 = arith.constant 0 : index
    %c0_154 = arith.constant 0 : index
    %120 = vector.load %arg8[%c0_152, %c0_153, %c0_154] : memref<1x8x16xf32, #tpu.memory_space<vmem>>, vector<1x8x16xf32>
    %121 = vector.shape_cast %120 : vector<1x8x16xf32> to vector<8x16xf32>
    %122 = vector.shape_cast %119 : vector<8x16xf32> to vector<1x8x16xf32>
    tpu.vector_store %arg8[%c0_152, %c0_153, %c0_154], %122 {strides = array<i32>} : memref<1x8x16xf32, #tpu.memory_space<vmem>>, vector<1x8x16xf32>,
    return
  }
  func.func @transform_0(%arg0: i32, %arg1: i32) -> (i32, i32, i32) {
    %c0_i32 = arith.constant 0 : i32
    %c0_i32_0 = arith.constant 0 : i32
    return %arg0, %c0_i32, %arg1 : i32, i32, i32
  }
  func.func @transform_1(%arg0: i32, %arg1: i32) -> (i32, i32, i32, i32) {
    %c0_i32 = arith.constant 0 : i32
    %c0_i32_0 = arith.constant 0 : i32
    %c0_i32_1 = arith.constant 0 : i32
    return %arg0, %arg1, %c0_i32, %c0_i32_0 : i32, i32, i32, i32
  }
  func.func @transform_2(%arg0: i32, %arg1: i32) -> (i32, i32) {
    %c0_i32 = arith.constant 0 : i32
    %c0_i32_0 = arith.constant 0 : i32
    %c0_i32_1 = arith.constant 0 : i32
    return %c0_i32, %c0_i32_0 : i32, i32
  }
  func.func @transform_3(%arg0: i32, %arg1: i32) -> (i32, i32) {
    %c0_i32 = arith.constant 0 : i32
    %c0_i32_0 = arith.constant 0 : i32
    %c0_i32_1 = arith.constant 0 : i32
    return %c0_i32, %c0_i32_0 : i32, i32
  }
  func.func @transform_4(%arg0: i32, %arg1: i32) -> (i32, i32) {
    %c0_i32 = arith.constant 0 : i32
    %c0_i32_0 = arith.constant 0 : i32
    %c0_i32_1 = arith.constant 0 : i32
    return %c0_i32, %c0_i32_0 : i32, i32
  }
  func.func @transform_5(%arg0: i32, %arg1: i32) -> (i32, i32) {
    %c0_i32 = arith.constant 0 : i32
    %c0_i32_0 = arith.constant 0 : i32
    %c0_i32_1 = arith.constant 0 : i32
    return %c0_i32, %c0_i32_0 : i32, i32
  }
  func.func @transform_6(%arg0: i32, %arg1: i32) -> (i32, i32, i32) {
    %c0_i32 = arith.constant 0 : i32
    %c0_i32_0 = arith.constant 0 : i32
    return %arg0, %c0_i32, %arg1 : i32, i32, i32
  }
}

</mosaic_0001>

<llo_original>
// kernel: tpu_custom_call.1
$region0: #{tpu_custom_call.1}
  #allocation0 [shape = 'u32[]', space=smem, size = 0x4, offset = 0x4, fixed_abs, tag = 'smem constant byte address 0x4 - core index']
  #allocation1 [shape = 'u32[144,128]{1,0:T(1,128)}', space=vmem, size = 0x12000, scoped, tag = 'internal scratch']
  #allocation2 [shape = 'bf16[256,16]{1,0:T(16,128)(2,1)}', space=vmem, size = 0x10000, scoped, tag = 'scratch operand']
  %s0 = inlined_call_operand.vmem [shape: bf16[2,16,16], index: 0, kind: input, shape index: {}]
  %s1 = inlined_call_operand.vmem [shape: bf16[2,1,16,15], index: 1, kind: input, shape index: {}]
  %s2 = inlined_call_operand.vmem [shape: bf16[48,256], index: 2, kind: input, shape index: {}]
  %s3 = inlined_call_operand.vmem [shape: f32[48,1], index: 3, kind: input, shape index: {}]
  %s4 = inlined_call_operand.vmem [shape: bf16[8,40], index: 4, kind: input, shape index: {}]
  %s5 = inlined_call_operand.vmem [shape: f32[8,1], index: 5, kind: input, shape index: {}]
  %s6 = inlined_call_operand.hbm [shape: f32[2,8,16], index: 6, kind: output, shape index: {}]
  %s7 = sld [smem:[#allocation0]]
  $region57: #{tpu_custom_call.1} parent=0
    _
  %s9 = ssub.s32 1, %s7
  %s10 = scalar_select 0, %s9, %s7
  $region1: #{tpu_custom_call.1} parent=0
    #allocation3 [shape = 'u8[8192]{0}', space=vmem, size = 0x2000, scoped, tag = 'output window, operand 0']
    #allocation4 [shape = 's32[2]{0}', space=sflag, size = 0x8, scoped, tag = 'scoped memory for tpu_custom_call.1']
    %11 = vsyncpa [#allocation4], 0
    %s12 = scalar_lea.sflag [#allocation4], 1
    %13 = vsyncpa %s12, 0
    loop: start=0, step=1, limit=4
    $region2: #{tpu_custom_call.1} parent=1 // loop_pre_header
      _
    $region3: #{tpu_custom_call.1} parent=1 // loop_header
      %s15 = sphi 0, %s19
      %p16 = scmp.ge.s32.totalorder %s15, 4
      %s22 = sphi 0, %s34
      %s23 = sphi 0, %s30
      %s24 = sphi 0, %s22
      %s25 = sphi 0, %s23
      %s26 = sphi 0, %s24
      %s27 = sphi 0, %s25
      %s39 = sphi 0, %s41
      %s42 = sphi 0, %s39
      %s43 = sphi 0, %s42
      %s59 = sphi 0, %s43
      %s67 = sphi 0, %s69
      %s70 = sphi 0, %s67
      %s71 = sphi 0, %s70
      %s87 = sphi 0, %s71
      %s91 = sphi 0, %s91
      %s93 = sphi 0, %s91
      %s94 = sphi 0, %s93
      %s108 = sphi 0, %s94
      %s112 = sphi 0, %s112
      %s114 = sphi 0, %s112
      %s115 = sphi 0, %s114
      %s129 = sphi 0, %s115
      %s133 = sphi 0, %s133
      %s135 = sphi 0, %s133
      %s136 = sphi 0, %s135
      %s150 = sphi 0, %s136
      %s154 = sphi 0, %s154
      %s156 = sphi 0, %s154
      %s157 = sphi 0, %s156
      %s171 = sphi 0, %s157
      %s179 = sphi 0, %s181
      %s182 = sphi 0, %s179
      %s183 = sphi 0, %s182
      %s199 = sphi 0, %s183
    $region4: #{tpu_custom_call.1} parent=1 // loop_header_branch
      %18 = sbr.rel (%p16) target = $region8
    $region5: #{tpu_custom_call.1} parent=1 // loop_body
      %s20 = ssub.s32 %s15, 1
      %s21 = ssub.s32 %s15, 2
      %s28 = sadd.s32 1, %s23
      %p29 = scmp.ge.s32.totalorder %s28, 1
      %s30 = scalar_select %p29, 0, %s28
      %s31 = sadd.s32 1, %s22
      %s32 = scalar_select %p29, %s31, %s22
      %p33 = scmp.ge.s32.totalorder %s32, 2
      %s34 = scalar_select %p33, 0, %s32
      %s35 = ssub.s32 %s22, %s34
      %s36 = ssub.s32 %s23, %s30
      %s37 = sor.u32 %s35, %s36
      %p38 = scmp.eq.s32.totalorder %s37, 0
      %s40 = sadd.s32 %s39, 1
      %s41 = scalar_select %p38, %s39, %s40
      %p44 = pneg %p38
      %p45 = scmp.eq.s32.totalorder %s15, 1
      %p46 = por %p44, %p45
      %p47 = scmp.ne.s32.totalorder %s39, %s42
      %p48 = scmp.eq.s32.totalorder %s15, 0
      %p49 = por %p47, %p48
      %p50 = scmp.ne.s32.totalorder %s39, %s42
      %p51 = scmp.eq.s32.totalorder %s20, 1
      %p52 = por %p50, %p51
      %p53 = scmp.ne.s32.totalorder %s42, %s43
      %p54 = scmp.eq.s32.totalorder %s20, 0
      %p55 = por %p53, %p54
      %p56 = scmp.ne.s32.totalorder %s42, %s43
      %p57 = scmp.eq.s32.totalorder %s21, 1
      %p58 = por %p56, %p57
      %p60 = scmp.ne.s32.totalorder %s43, %s59
      %p61 = scmp.eq.s32.totalorder %s21, 0
      %p62 = por %p60, %p61
      %s63 = ssub.s32 %s22, %s34
      %s64 = ssub.s32 %s23, %s30
      %s65 = sor.u32 %s63, %s64
      %p66 = scmp.eq.s32.totalorder %s65, 0
      %s68 = sadd.s32 %s67, 1
      %s69 = scalar_select %p66, %s67, %s68
      %p72 = pneg %p66
      %p73 = scmp.eq.s32.totalorder %s15, 1
      %p74 = por %p72, %p73
      %p75 = scmp.ne.s32.totalorder %s67, %s70
      %p76 = scmp.eq.s32.totalorder %s15, 0
      %p77 = por %p75, %p76
      %p78 = scmp.ne.s32.totalorder %s67, %s70
      %p79 = scmp.eq.s32.totalorder %s20, 1
      %p80 = por %p78, %p79
      %p81 = scmp.ne.s32.totalorder %s70, %s71
      %p82 = scmp.eq.s32.totalorder %s20, 0
      %p83 = por %p81, %p82
      %p84 = scmp.ne.s32.totalorder %s70, %s71
      %p85 = scmp.eq.s32.totalorder %s21, 1
      %p86 = por %p84, %p85
      %p88 = scmp.ne.s32.totalorder %s71, %s87
      %p89 = scmp.eq.s32.totalorder %s21, 0
      %p90 = por %p88, %p89
      %s92 = sadd.s32 %s91, 1
      %p95 = scmp.eq.s32.totalorder %s15, 1
      %p96 = scmp.ne.s32.totalorder %s91, %s93
      %p97 = scmp.eq.s32.totalorder %s15, 0
      %p98 = por %p96, %p97
      %p99 = scmp.ne.s32.totalorder %s91, %s93
      %p100 = scmp.eq.s32.totalorder %s20, 1
      %p101 = por %p99, %p100
      %p102 = scmp.ne.s32.totalorder %s93, %s94
      %p103 = scmp.eq.s32.totalorder %s20, 0
      %p104 = por %p102, %p103
      %p105 = scmp.ne.s32.totalorder %s93, %s94
      %p106 = scmp.eq.s32.totalorder %s21, 1
      %p107 = por %p105, %p106
      %p109 = scmp.ne.s32.totalorder %s94, %s108
      %p110 = scmp.eq.s32.totalorder %s21, 0
      %p111 = por %p109, %p110
      %s113 = sadd.s32 %s112, 1
      %p116 = scmp.eq.s32.totalorder %s15, 1
      %p117 = scmp.ne.s32.totalorder %s112, %s114
      %p118 = scmp.eq.s32.totalorder %s15, 0
      %p119 = por %p117, %p118
      %p120 = scmp.ne.s32.totalorder %s112, %s114
      %p121 = scmp.eq.s32.totalorder %s20, 1
      %p122 = por %p120, %p121
      %p123 = scmp.ne.s32.totalorder %s114, %s115
      %p124 = scmp.eq.s32.totalorder %s20, 0
      %p125 = por %p123, %p124
      %p126 = scmp.ne.s32.totalorder %s114, %s115
      %p127 = scmp.eq.s32.totalorder %s21, 1
      %p128 = por %p126, %p127
      %p130 = scmp.ne.s32.totalorder %s115, %s129
      %p131 = scmp.eq.s32.totalorder %s21, 0
      %p132 = por %p130, %p131
      %s134 = sadd.s32 %s133, 1
      %p137 = scmp.eq.s32.totalorder %s15, 1
      %p138 = scmp.ne.s32.totalorder %s133, %s135
      %p139 = scmp.eq.s32.totalorder %s15, 0
      %p140 = por %p138, %p139
      %p141 = scmp.ne.s32.totalorder %s133, %s135
      %p142 = scmp.eq.s32.totalorder %s20, 1
      %p143 = por %p141, %p142
      %p144 = scmp.ne.s32.totalorder %s135, %s136
      %p145 = scmp.eq.s32.totalorder %s20, 0
      %p146 = por %p144, %p145
      %p147 = scmp.ne.s32.totalorder %s135, %s136
      %p148 = scmp.eq.s32.totalorder %s21, 1
      %p149 = por %p147, %p148
      %p151 = scmp.ne.s32.totalorder %s136, %s150
      %p152 = scmp.eq.s32.totalorder %s21, 0
      %p153 = por %p151, %p152
      %s155 = sadd.s32 %s154, 1
      %p158 = scmp.eq.s32.totalorder %s15, 1
      %p159 = scmp.ne.s32.totalorder %s154, %s156
      %p160 = scmp.eq.s32.totalorder %s15, 0
      %p161 = por %p159, %p160
      %p162 = scmp.ne.s32.totalorder %s154, %s156
      %p163 = scmp.eq.s32.totalorder %s20, 1
      %p164 = por %p162, %p163
      %p165 = scmp.ne.s32.totalorder %s156, %s157
      %p166 = scmp.eq.s32.totalorder %s20, 0
      %p167 = por %p165, %p166
      %p168 = scmp.ne.s32.totalorder %s156, %s157
      %p169 = scmp.eq.s32.totalorder %s21, 1
      %p170 = por %p168, %p169
      %p172 = scmp.ne.s32.totalorder %s157, %s171
      %p173 = scmp.eq.s32.totalorder %s21, 0
      %p174 = por %p172, %p173
      %s175 = ssub.s32 %s22, %s34
      %s176 = ssub.s32 %s23, %s30
      %s177 = sor.u32 %s175, %s176
      %p178 = scmp.eq.s32.totalorder %s177, 0
      %s180 = sadd.s32 %s179, 1
      %s181 = scalar_select %p178, %s179, %s180
      %p184 = pneg %p178
      %p185 = scmp.eq.s32.totalorder %s15, 1
      %p186 = por %p184, %p185
      %p187 = scmp.ne.s32.totalorder %s179, %s182
      %p188 = scmp.eq.s32.totalorder %s15, 0
      %p189 = por %p187, %p188
      %p190 = scmp.ne.s32.totalorder %s179, %s182
      %p191 = scmp.eq.s32.totalorder %s20, 1
      %p192 = por %p190, %p191
      %p193 = scmp.ne.s32.totalorder %s182, %s183
      %p194 = scmp.eq.s32.totalorder %s20, 0
      %p195 = por %p193, %p194
      %p196 = scmp.ne.s32.totalorder %s182, %s183
      %p197 = scmp.eq.s32.totalorder %s21, 1
      %p198 = por %p196, %p197
      %p200 = scmp.ne.s32.totalorder %s183, %s199
      %p201 = scmp.eq.s32.totalorder %s21, 0
      %p202 = por %p200, %p201
      %p203 = scmp.le.s32.totalorder 1, %s15
      %p204 = scmp.lt.s32.totalorder %s15, 3
      %p205 = pnand %p203, %p204
      %p206 = pneg %p205
      // Predicated region
      $region9: #{tpu_custom_call.1} parent=5 // pred_check
        _
      $region10: #{tpu_custom_call.1} parent=5 // pred_check_branch
        %208 = sbr.rel (%p205) target = $region12
      $region11: #{tpu_custom_call.1} parent=5 // pred_region
        %s209 = ssub.s32 %s15, 1
        // Predicated region
        $region13: #{tpu_custom_call.1} parent=11 // pred_check
          %p210 = pneg %p104
        $region14: #{tpu_custom_call.1} parent=11 // pred_check_branch
          %212 = sbr.rel (%p210) target = $region16
        $region15: #{tpu_custom_call.1} parent=11 // pred_region
          _
        $region16: #{tpu_custom_call.1} parent=11 // pred_fallthru
          _
        // Predicated region
        $region17: #{tpu_custom_call.1} parent=11 // pred_check
          %p213 = pneg %p125
        $region18: #{tpu_custom_call.1} parent=11 // pred_check_branch
          %215 = sbr.rel (%p213) target = $region20
        $region19: #{tpu_custom_call.1} parent=11 // pred_region
          _
        $region20: #{tpu_custom_call.1} parent=11 // pred_fallthru
          _
        // Predicated region
        $region21: #{tpu_custom_call.1} parent=11 // pred_check
          %p216 = pneg %p146
        $region22: #{tpu_custom_call.1} parent=11 // pred_check_branch
          %218 = sbr.rel (%p216) target = $region24
        $region23: #{tpu_custom_call.1} parent=11 // pred_region
          _
        $region24: #{tpu_custom_call.1} parent=11 // pred_fallthru
          _
        // Predicated region
        $region25: #{tpu_custom_call.1} parent=11 // pred_check
          %p219 = pneg %p167
        $region26: #{tpu_custom_call.1} parent=11 // pred_check_branch
          %221 = sbr.rel (%p219) target = $region28
        $region27: #{tpu_custom_call.1} parent=11 // pred_region
          _
        $region28: #{tpu_custom_call.1} parent=11 // pred_fallthru
          _
      $region12: #{tpu_custom_call.1} parent=5 // pred_fallthru
        _
      %p222 = scmp.lt.s32.totalorder %s15, 2
      // Predicated region
      $region29: #{tpu_custom_call.1} parent=5 // pred_check
        %p223 = pneg %p222
      $region30: #{tpu_custom_call.1} parent=5 // pred_check_branch
        %225 = sbr.rel (%p223) target = $region32
      $region31: #{tpu_custom_call.1} parent=5 // pred_region
        // Predicated region
        $region33: #{tpu_custom_call.1} parent=31 // pred_check
          %p226 = pneg %p49
        $region34: #{tpu_custom_call.1} parent=31 // pred_check_branch
          %228 = sbr.rel (%p226) target = $region36
        $region35: #{tpu_custom_call.1} parent=31 // pred_region
          %p229 = scmp.lt.s32.totalorder %s22, 1
          %s230 = scalar_select %p229, %s22, 1
          %p231 = scmp.lt.s32.totalorder %s23, 0
          %s232 = scalar_select %p231, %s23, 0
          %s233 = smul.addr %s230, 2
          %s234 = sadd.s32 %s232, %s233
          %s235 = smul.addr %s234, 4
          %s236 = scalar_lea.vmem %s0, %s235
        $region36: #{tpu_custom_call.1} parent=31 // pred_fallthru
          _
        // Predicated region
        $region37: #{tpu_custom_call.1} parent=31 // pred_check
          %p237 = pneg %p77
        $region38: #{tpu_custom_call.1} parent=31 // pred_check_branch
          %239 = sbr.rel (%p237) target = $region40
        $region39: #{tpu_custom_call.1} parent=31 // pred_region
          %p240 = scmp.lt.s32.totalorder %s22, 1
          %s241 = scalar_select %p240, %s22, 1
          %p242 = scmp.lt.s32.totalorder %s23, 0
          %s243 = scalar_select %p242, %s23, 0
          %s244 = smul.addr %s243, 2
          %s245 = smul.addr %s241, 2
          %s246 = sadd.s32 %s244, %s245
          %s247 = smul.addr %s246, 4
          %s248 = scalar_lea.vmem %s1, %s247
        $region40: #{tpu_custom_call.1} parent=31 // pred_fallthru
          _
      $region32: #{tpu_custom_call.1} parent=5 // pred_fallthru
        _
      %p249 = scmp.le.s32.totalorder 1, %s15
      %p250 = scmp.lt.s32.totalorder %s15, 3
      %p251 = pnand %p249, %p250
      %p252 = pneg %p251
      // Predicated region
      $region41: #{tpu_custom_call.1} parent=5 // pred_check
        _
      $region42: #{tpu_custom_call.1} parent=5 // pred_check_branch
        %254 = sbr.rel (%p251) target = $region44
      $region43: #{tpu_custom_call.1} parent=5 // pred_region
        %s255 = ssub.s32 %s15, 1
        %p256 = scmp.lt.s32.totalorder %s24, 1
        %s257 = scalar_select %p256, %s24, 1
        %p258 = scmp.lt.s32.totalorder %s25, 0
        %s259 = scalar_select %p258, %s25, 0
        %s260 = smul.addr %s257, 2
        %s261 = sadd.s32 %s259, %s260
        %s262 = smul.addr %s261, 4
        %s263 = scalar_lea.vmem %s0, %s262
        %p264 = pneg %p55
        %p265 = pneg %p52
        %p266 = scmp.lt.s32.totalorder %s24, 1
        %s267 = scalar_select %p266, %s24, 1
        %p268 = scmp.lt.s32.totalorder %s25, 0
        %s269 = scalar_select %p268, %s25, 0
        %s270 = smul.addr %s269, 2
        %s271 = smul.addr %s267, 2
        %s272 = sadd.s32 %s270, %s271
        %s273 = smul.addr %s272, 4
        %s274 = scalar_lea.vmem %s1, %s273
        %p275 = pneg %p83
        %p276 = pneg %p80
        %p277 = pneg %p104
        %p278 = pneg %p101
        %p279 = pneg %p125
        %p280 = pneg %p122
        %p281 = pneg %p146
        %p282 = pneg %p143
        %p283 = pneg %p167
        %p284 = pneg %p164
        %p285 = pneg %p195
        %p286 = pneg %p192
        %s287 = sand.u32 %s182, 1
        %s288 = scalar_lea.sflag [#allocation4], %s287
        %s289 = sand.u32 %s182, 1
        %s290 = smul.addr %s289, 8
        %s291 = scalar_lea.vmem [#allocation3], %s290
        %p292 = scmp.lt.s32.totalorder %s24, 1
        %s293 = scalar_select %p292, %s24, 1
        %p294 = scmp.lt.s32.totalorder %s25, 0
        %s295 = scalar_select %p294, %s25, 0
        %s296 = smul.addr %s293, 2
        %s297 = sadd.s32 %s295, %s296
        %s298 = smul.addr %s297, 4
        %s299 = scalar_lea.vmem %s0, %s298
        %p300 = scmp.lt.s32.totalorder %s24, 1
        %s301 = scalar_select %p300, %s24, 1
        %p302 = scmp.lt.s32.totalorder %s25, 0
        %s303 = scalar_select %p302, %s25, 0
        %s304 = smul.addr %s303, 2
        %s305 = smul.addr %s301, 2
        %s306 = sadd.s32 %s304, %s305
        %s307 = smul.addr %s306, 4
        %s308 = scalar_lea.vmem %s1, %s307
        %v310 = vld [vmem:[%s308] sm:$0xf]
        %v311 = vld [vmem:[%s308 + $0x4] sm:$0xf]
        %v314 = vunpack.c.l.b16 %v310
        %v315 = vunpack.c.l.b16 %v311
        %v316 = vpack.c.b16 %v315, %v314
        %vm318 = vcmask 56320
        %319 = vst.msk [vmem:[#allocation2] sm:$0xff] %vm318, %v316
        %v320 = vld [vmem:[%s299] sm:$0xf]
        %v321 = vld [vmem:[%s299 + $0x4] sm:$0xf]
        %v324 = vunpack.c.l.b16 %v320
        %v325 = vunpack.c.l.b16 %v321
        %v326 = vpack.c.b16 %v325, %v324
        %327 = vrot.lane.b32.xlu0 %v326, 7
        %v328 = vpop.permute.xlu0 %327
        %vm330 = vcmask 130104
        %331 = vst.msk [vmem:[#allocation2] sm:$0xff] %vm330, %v328
        %v332 = vld [vmem:[%s308] sm:$0xf]
        %v333 = vld [vmem:[%s308 + $0x4] sm:$0xf]
        %v336 = vunpack.c.l.b16 %v332
        %v337 = vunpack.c.l.b16 %v333
        %v338 = vpack.c.b16 %v337, %v336
        %339 = vrot.lane.b32.xlu0 %v338, 127
        %v340 = vpop.permute.xlu0 %339
        %vm342 = vcmask 48128
        %343 = vst.msk [vmem:[#allocation2 + $0x8] sm:$0xff] %vm342, %v340
        %v344 = vld [vmem:[%s299] sm:$0xf]
        %v345 = vld [vmem:[%s299 + $0x4] sm:$0xf]
        %v348 = vunpack.c.l.b16 %v344
        %v349 = vunpack.c.l.b16 %v345
        %v350 = vpack.c.b16 %v349, %v348
        %351 = vrot.lane.b32.xlu0 %v350, 6
        %v352 = vpop.permute.xlu0 %351
        %vm354 = vcmask 130096
        %355 = vst.msk [vmem:[#allocation2 + $0x8] sm:$0xff] %vm354, %v352
        %v356 = vld [vmem:[%s308] sm:$0xf]
        %v357 = vld [vmem:[%s308 + $0x4] sm:$0xf]
        %v360 = vunpack.c.l.b16 %v356
        %v361 = vunpack.c.l.b16 %v357
        %v362 = vpack.c.b16 %v361, %v360
        %363 = vrot.lane.b32.xlu0 %v362, 126
        %v364 = vpop.permute.xlu0 %363
        %vm366 = vcmask 39936
        %367 = vst.msk [vmem:[#allocation2 + $0x10] sm:$0xff] %vm366, %v364
        %v368 = vld [vmem:[%s299] sm:$0xf]
        %v369 = vld [vmem:[%s299 + $0x4] sm:$0xf]
        %v372 = vunpack.c.l.b16 %v368
        %v373 = vunpack.c.l.b16 %v369
        %v374 = vpack.c.b16 %v373, %v372
        %375 = vrot.lane.b32.xlu0 %v374, 5
        %v376 = vpop.permute.xlu0 %375
        %vm378 = vcmask 130088
        %379 = vst.msk [vmem:[#allocation2 + $0x10] sm:$0xff] %vm378, %v376
        %v380 = vld [vmem:[%s308] sm:$0xf]
        %v381 = vld [vmem:[%s308 + $0x4] sm:$0xf]
        %v384 = vunpack.c.l.b16 %v380
        %v385 = vunpack.c.l.b16 %v381
        %v386 = vpack.c.b16 %v385, %v384
        %387 = vrot.lane.b32.xlu0 %v386, 125
        %v388 = vpop.permute.xlu0 %387
        %vm390 = vcmask 31744
        %391 = vst.msk [vmem:[#allocation2 + $0x18] sm:$0xff] %vm390, %v388
        %v392 = vld [vmem:[%s299] sm:$0xf]
        %v393 = vld [vmem:[%s299 + $0x4] sm:$0xf]
        %v396 = vunpack.c.l.b16 %v392
        %v397 = vunpack.c.l.b16 %v393
        %v398 = vpack.c.b16 %v397, %v396
        %399 = vrot.lane.b32.xlu0 %v398, 4
        %v400 = vpop.permute.xlu0 %399
        %vm402 = vcmask 130080
        %403 = vst.msk [vmem:[#allocation2 + $0x18] sm:$0xff] %vm402, %v400
        %v404 = vld [vmem:[%s308] sm:$0xf]
        %v405 = vld [vmem:[%s308 + $0x4] sm:$0xf]
        %v408 = vunpack.c.l.b16 %v404
        %v409 = vunpack.c.l.b16 %v405
        %v410 = vpack.c.b16 %v409, %v408
        %411 = vrot.lane.b32.xlu0 %v410, 124
        %v412 = vpop.permute.xlu0 %411
        %vm414 = vcmask 23552
        %415 = vst.msk [vmem:[#allocation2 + $0x20] sm:$0xff] %vm414, %v412
        %v416 = vld [vmem:[%s299] sm:$0xf]
        %v417 = vld [vmem:[%s299 + $0x4] sm:$0xf]
        %v420 = vunpack.c.l.b16 %v416
        %v421 = vunpack.c.l.b16 %v417
        %v422 = vpack.c.b16 %v421, %v420
        %423 = vrot.lane.b32.xlu0 %v422, 3
        %v424 = vpop.permute.xlu0 %423
        %vm426 = vcmask 130072
        %427 = vst.msk [vmem:[#allocation2 + $0x20] sm:$0xff] %vm426, %v424
        %v428 = vld [vmem:[%s308] sm:$0xf]
        %v429 = vld [vmem:[%s308 + $0x4] sm:$0xf]
        %v432 = vunpack.c.l.b16 %v428
        %v433 = vunpack.c.l.b16 %v429
        %v434 = vpack.c.b16 %v433, %v432
        %435 = vrot.lane.b32.xlu0 %v434, 123
        %v436 = vpop.permute.xlu0 %435
        %vm438 = vcmask 15360
        %439 = vst.msk [vmem:[#allocation2 + $0x28] sm:$0xff] %vm438, %v436
        %v440 = vld [vmem:[%s299] sm:$0xf]
        %v441 = vld [vmem:[%s299 + $0x4] sm:$0xf]
        %v444 = vunpack.c.l.b16 %v440
        %v445 = vunpack.c.l.b16 %v441
        %v446 = vpack.c.b16 %v445, %v444
        %447 = vrot.lane.b32.xlu0 %v446, 2
        %v448 = vpop.permute.xlu0 %447
        %vm450 = vcmask 130064
        %451 = vst.msk [vmem:[#allocation2 + $0x28] sm:$0xff] %vm450, %v448
        %v452 = vld [vmem:[%s308] sm:$0xf]
        %v453 = vld [vmem:[%s308 + $0x4] sm:$0xf]
        %v456 = vunpack.c.l.b16 %v452
        %v457 = vunpack.c.l.b16 %v453
        %v458 = vpack.c.b16 %v457, %v456
        %459 = vrot.lane.b32.xlu0 %v458, 122
        %v460 = vpop.permute.xlu0 %459
        %vm462 = vcmask 7168
        %463 = vst.msk [vmem:[#allocation2 + $0x30] sm:$0xff] %vm462, %v460
        %v464 = vld [vmem:[%s299] sm:$0xf]
        %v465 = vld [vmem:[%s299 + $0x4] sm:$0xf]
        %v468 = vunpack.c.l.b16 %v464
        %v469 = vunpack.c.l.b16 %v465
        %v470 = vpack.c.b16 %v469, %v468
        %471 = vrot.lane.b32.xlu0 %v470, 1
        %v472 = vpop.permute.xlu0 %471
        %vm474 = vcmask 130056
        %475 = vst.msk [vmem:[#allocation2 + $0x30] sm:$0xff] %vm474, %v472
        %v476 = vld [vmem:[%s299] sm:$0xf]
        %v477 = vld [vmem:[%s299 + $0x4] sm:$0xf]
        %v480 = vunpack.c.l.b16 %v476
        %v481 = vunpack.c.l.b16 %v477
        %v482 = vpack.c.b16 %v481, %v480
        %vm484 = vcmask 130048
        %485 = vst.msk [vmem:[#allocation2 + $0x38] sm:$0xff] %vm484, %v482
        %v486 = vld [vmem:[%s299] sm:$0xf]
        %v487 = vld [vmem:[%s299 + $0x4] sm:$0xf]
        %v490 = vunpack.c.l.b16 %v486
        %v491 = vunpack.c.l.b16 %v487
        %v492 = vpack.c.b16 %v491, %v490
        %493 = vrot.lane.b32.xlu0 %v492, 127
        %v494 = vpop.permute.xlu0 %493
        %vm496 = vcmask 121856
        %497 = vst.msk [vmem:[#allocation2 + $0x40] sm:$0xff] %vm496, %v494
        %v498 = vld [vmem:[%s308] sm:$0xf]
        %v499 = vld [vmem:[%s308 + $0x4] sm:$0xf]
        %v502 = vunpack.c.l.b16 %v498
        %v503 = vunpack.c.l.b16 %v499
        %v504 = vpack.c.b16 %v503, %v502
        %505 = vrot.lane.b32.xlu0 %v504, 8
        %v506 = vpop.permute.xlu0 %505
        %vm508 = vcmask 130168
        %509 = vst.msk [vmem:[#allocation2 + $0x40] sm:$0xff] %vm508, %v506
        %v510 = vld [vmem:[%s299] sm:$0xf]
        %v511 = vld [vmem:[%s299 + $0x4] sm:$0xf]
        %v514 = vunpack.c.l.b16 %v510
        %v515 = vunpack.c.l.b16 %v511
        %v516 = vpack.c.b16 %v515, %v514
        %517 = vrot.lane.b32.xlu0 %v516, 126
        %v518 = vpop.permute.xlu0 %517
        %vm520 = vcmask 113664
        %521 = vst.msk [vmem:[#allocation2 + $0x48] sm:$0xff] %vm520, %v518
        %v522 = vld [vmem:[%s308] sm:$0xf]
        %v523 = vld [vmem:[%s308 + $0x4] sm:$0xf]
        %v526 = vunpack.c.l.b16 %v522
        %v527 = vunpack.c.l.b16 %v523
        %v528 = vpack.c.b16 %v527, %v526
        %529 = vrot.lane.b32.xlu0 %v528, 7
        %v530 = vpop.permute.xlu0 %529
        %vm532 = vcmask 130160
        %533 = vst.msk [vmem:[#allocation2 + $0x48] sm:$0xff] %vm532, %v530
        %v534 = vld [vmem:[%s299] sm:$0xf]
        %v535 = vld [vmem:[%s299 + $0x4] sm:$0xf]
        %v538 = vunpack.c.l.b16 %v534
        %v539 = vunpack.c.l.b16 %v535
        %v540 = vpack.c.b16 %v539, %v538
        %541 = vrot.lane.b32.xlu0 %v540, 125
        %v542 = vpop.permute.xlu0 %541
        %vm544 = vcmask 105472
        %545 = vst.msk [vmem:[#allocation2 + $0x50] sm:$0xff] %vm544, %v542
        %v546 = vld [vmem:[%s308] sm:$0xf]
        %v547 = vld [vmem:[%s308 + $0x4] sm:$0xf]
        %v550 = vunpack.c.l.b16 %v546
        %v551 = vunpack.c.l.b16 %v547
        %v552 = vpack.c.b16 %v551, %v550
        %553 = vrot.lane.b32.xlu0 %v552, 6
        %v554 = vpop.permute.xlu0 %553
        %vm556 = vcmask 130152
        %557 = vst.msk [vmem:[#allocation2 + $0x50] sm:$0xff] %vm556, %v554
        %v558 = vld [vmem:[%s299] sm:$0xf]
        %v559 = vld [vmem:[%s299 + $0x4] sm:$0xf]
        %v562 = vunpack.c.l.b16 %v558
        %v563 = vunpack.c.l.b16 %v559
        %v564 = vpack.c.b16 %v563, %v562
        %565 = vrot.lane.b32.xlu0 %v564, 124
        %v566 = vpop.permute.xlu0 %565
        %vm568 = vcmask 97280
        %569 = vst.msk [vmem:[#allocation2 + $0x58] sm:$0xff] %vm568, %v566
        %v570 = vld [vmem:[%s308] sm:$0xf]
        %v571 = vld [vmem:[%s308 + $0x4] sm:$0xf]
        %v574 = vunpack.c.l.b16 %v570
        %v575 = vunpack.c.l.b16 %v571
        %v576 = vpack.c.b16 %v575, %v574
        %577 = vrot.lane.b32.xlu0 %v576, 5
        %v578 = vpop.permute.xlu0 %577
        %vm580 = vcmask 130144
        %581 = vst.msk [vmem:[#allocation2 + $0x58] sm:$0xff] %vm580, %v578
        %v582 = vld [vmem:[%s299] sm:$0xf]
        %v583 = vld [vmem:[%s299 + $0x4] sm:$0xf]
        %v586 = vunpack.c.l.b16 %v582
        %v587 = vunpack.c.l.b16 %v583
        %v588 = vpack.c.b16 %v587, %v586
        %589 = vrot.lane.b32.xlu0 %v588, 123
        %v590 = vpop.permute.xlu0 %589
        %vm592 = vcmask 89088
        %593 = vst.msk [vmem:[#allocation2 + $0x60] sm:$0xff] %vm592, %v590
        %v594 = vld [vmem:[%s308] sm:$0xf]
        %v595 = vld [vmem:[%s308 + $0x4] sm:$0xf]
        %v598 = vunpack.c.l.b16 %v594
        %v599 = vunpack.c.l.b16 %v595
        %v600 = vpack.c.b16 %v599, %v598
        %601 = vrot.lane.b32.xlu0 %v600, 4
        %v602 = vpop.permute.xlu0 %601
        %vm604 = vcmask 130136
        %605 = vst.msk [vmem:[#allocation2 + $0x60] sm:$0xff] %vm604, %v602
        %v606 = vld [vmem:[%s299] sm:$0xf]
        %v607 = vld [vmem:[%s299 + $0x4] sm:$0xf]
        %v610 = vunpack.c.l.b16 %v606
        %v611 = vunpack.c.l.b16 %v607
        %v612 = vpack.c.b16 %v611, %v610
        %613 = vrot.lane.b32.xlu0 %v612, 122
        %v614 = vpop.permute.xlu0 %613
        %vm616 = vcmask 80896
        %617 = vst.msk [vmem:[#allocation2 + $0x68] sm:$0xff] %vm616, %v614
        %v618 = vld [vmem:[%s308] sm:$0xf]
        %v619 = vld [vmem:[%s308 + $0x4] sm:$0xf]
        %v622 = vunpack.c.l.b16 %v618
        %v623 = vunpack.c.l.b16 %v619
        %v624 = vpack.c.b16 %v623, %v622
        %625 = vrot.lane.b32.xlu0 %v624, 3
        %v626 = vpop.permute.xlu0 %625
        %vm628 = vcmask 130128
        %629 = vst.msk [vmem:[#allocation2 + $0x68] sm:$0xff] %vm628, %v626
        %v630 = vld [vmem:[%s299] sm:$0xf]
        %v631 = vld [vmem:[%s299 + $0x4] sm:$0xf]
        %v634 = vunpack.c.l.b16 %v630
        %v635 = vunpack.c.l.b16 %v631
        %v636 = vpack.c.b16 %v635, %v634
        %637 = vrot.lane.b32.xlu0 %v636, 121
        %v638 = vpop.permute.xlu0 %637
        %vm640 = vcmask 72704
        %641 = vst.msk [vmem:[#allocation2 + $0x70] sm:$0xff] %vm640, %v638
        %v642 = vld [vmem:[%s308] sm:$0xf]
        %v643 = vld [vmem:[%s308 + $0x4] sm:$0xf]
        %v646 = vunpack.c.l.b16 %v642
        %v647 = vunpack.c.l.b16 %v643
        %v648 = vpack.c.b16 %v647, %v646
        %649 = vrot.lane.b32.xlu0 %v648, 2
        %v650 = vpop.permute.xlu0 %649
        %vm652 = vcmask 130120
        %653 = vst.msk [vmem:[#allocation2 + $0x70] sm:$0xff] %vm652, %v650
        %v654 = vld [vmem:[%s299] sm:$0xf]
        %v655 = vld [vmem:[%s299 + $0x4] sm:$0xf]
        %v658 = vunpack.c.l.b16 %v654
        %v659 = vunpack.c.l.b16 %v655
        %v660 = vpack.c.b16 %v659, %v658
        %661 = vrot.lane.b32.xlu0 %v660, 120
        %v662 = vpop.permute.xlu0 %661
        %vm664 = vcmask 64512
        %665 = vst.msk [vmem:[#allocation2 + $0x78] sm:$0xff] %vm664, %v662
        %v666 = vld [vmem:[%s308] sm:$0xf]
        %v667 = vld [vmem:[%s308 + $0x4] sm:$0xf]
        %v670 = vunpack.c.l.b16 %v666
        %v671 = vunpack.c.l.b16 %v667
        %v672 = vpack.c.b16 %v671, %v670
        %673 = vrot.lane.b32.xlu0 %v672, 1
        %v674 = vpop.permute.xlu0 %673
        %vm676 = vcmask 130112
        %677 = vst.msk [vmem:[#allocation2 + $0x78] sm:$0xff] %vm676, %v674
        %v678 = vld [vmem:[#allocation2] sm:$0xff]
        %v679 = vld [vmem:[#allocation2 + $0x8] sm:$0xff]
        %v680 = vld [vmem:[#allocation2 + $0x10] sm:$0xff]
        %v681 = vld [vmem:[#allocation2 + $0x18] sm:$0xff]
        %v682 = vld [vmem:[#allocation2 + $0x20] sm:$0xff]
        %v683 = vld [vmem:[#allocation2 + $0x28] sm:$0xff]
        %v684 = vld [vmem:[#allocation2 + $0x30] sm:$0xff]
        %v685 = vld [vmem:[#allocation2 + $0x38] sm:$0xff]
        %v686 = vld [vmem:[#allocation2 + $0x40] sm:$0xff]
        %v687 = vld [vmem:[#allocation2 + $0x48] sm:$0xff]
        %v688 = vld [vmem:[#allocation2 + $0x50] sm:$0xff]
        %v689 = vld [vmem:[#allocation2 + $0x58] sm:$0xff]
        %v690 = vld [vmem:[#allocation2 + $0x60] sm:$0xff]
        %v691 = vld [vmem:[#allocation2 + $0x68] sm:$0xff]
        %v692 = vld [vmem:[#allocation2 + $0x70] sm:$0xff]
        %v693 = vld [vmem:[#allocation2 + $0x78] sm:$0xff]
        %v694 = vld [vmem:[%s2] sm:$0xff]
        %v695 = vld [vmem:[%s2 + $0x8] sm:$0xff]
        %v696 = vld [vmem:[%s2 + $0x10] sm:$0xff]
        %v697 = vld [vmem:[%s2 + $0x18] sm:$0xff]
        %v698 = vld [vmem:[%s2 + $0x20] sm:$0xff]
        %v699 = vld [vmem:[%s2 + $0x28] sm:$0xff]
        %v700 = vld [vmem:[%s3] sm:$0xff]
        %v701 = vld [vmem:[%s3 + $0x8] sm:$0xff]
        %v702 = vld [vmem:[%s3 + $0x10] sm:$0xff]
        %v703 = vld [vmem:[%s3 + $0x18] sm:$0xff]
        %v704 = vld [vmem:[%s3 + $0x20] sm:$0xff]
        %v705 = vld [vmem:[%s3 + $0x28] sm:$0xff]
        %707 = vset.pattern.permute.xlu0 0
        %708 = vperm.xlu0 %707, %v700
        %v709 = vpop.permute.xlu0 %708
        %712 = vset.pattern.permute.xlu0 0
        %713 = vperm.xlu0 %712, %v701
        %v714 = vpop.permute.xlu0 %713
        %717 = vset.pattern.permute.xlu0 0
        %718 = vperm.xlu0 %717, %v702
        %v719 = vpop.permute.xlu0 %718
        %722 = vset.pattern.permute.xlu0 0
        %723 = vperm.xlu0 %722, %v703
        %v724 = vpop.permute.xlu0 %723
        %727 = vset.pattern.permute.xlu0 0
        %728 = vperm.xlu0 %727, %v704
        %v729 = vpop.permute.xlu0 %728
        %732 = vset.pattern.permute.xlu0 0
        %733 = vperm.xlu0 %732, %v705
        %v734 = vpop.permute.xlu0 %733
        %v742 = vunpack.c.l.b16 %v694
        %v743 = vunpack.c.h.b16 %v694
        %v744 = vunpack.c.l.b16 %v695
        %v745 = vunpack.c.h.b16 %v695
        %v746 = vunpack.c.l.b16 %v696
        %v747 = vunpack.c.h.b16 %v696
        %v748 = vunpack.c.l.b16 %v697
        %v749 = vunpack.c.h.b16 %v697
        %v750 = vunpack.c.l.b16 %v698
        %v751 = vunpack.c.h.b16 %v698
        %v752 = vunpack.c.l.b16 %v699
        %v753 = vunpack.c.h.b16 %v699
        %v754 = vpack.c.b16 %v744, %v742
        %v755 = vpack.c.b16 %v745, %v743
        %v756 = vpack.c.b16 %v748, %v746
        %v757 = vpack.c.b16 %v749, %v747
        %v758 = vpack.c.b16 %v752, %v750
        %v759 = vpack.c.b16 %v753, %v751
        %766 = vmatprep.subr.bf16.mxu0 0
        %767 = vmatpush1.bf16.msra.mxu0 %v678
        %768 = vmatprep.subr.bf16.mxu0 0
        %769 = vmatpush1.bf16.msra.mxu0 %v679
        %770 = vmatprep.subr.bf16.mxu0 0
        %771 = vmatpush1.bf16.msra.mxu0 %v680
        %772 = vmatprep.subr.bf16.mxu0 0
        %773 = vmatpush1.bf16.msra.mxu0 %v681
        %774 = vmatprep.subr.bf16.mxu0 0
        %775 = vmatpush1.bf16.msra.mxu0 %v682
        %776 = vmatprep.subr.bf16.mxu0 0
        %777 = vmatpush1.bf16.msra.mxu0 %v683
        %778 = vmatprep.subr.bf16.mxu0 0
        %779 = vmatpush1.bf16.msra.mxu0 %v684
        %780 = vmatprep.subr.bf16.mxu0 0
        %781 = vmatpush1.bf16.msra.mxu0 %v685
        %782 = vmatprep.subr.bf16.mxu0 0
        %783 = vmatpush1.bf16.msra.mxu0 %v686
        %784 = vmatprep.subr.bf16.mxu0 0
        %785 = vmatpush1.bf16.msra.mxu0 %v687
        %786 = vmatprep.subr.bf16.mxu0 0
        %787 = vmatpush1.bf16.msra.mxu0 %v688
        %788 = vmatprep.subr.bf16.mxu0 0
        %789 = vmatpush1.bf16.msra.mxu0 %v689
        %790 = vmatprep.subr.bf16.mxu0 0
        %791 = vmatpush1.bf16.msra.mxu0 %v690
        %792 = vmatprep.subr.bf16.mxu0 0
        %793 = vmatpush1.bf16.msra.mxu0 %v691
        %794 = vmatprep.subr.bf16.mxu0 0
        %795 = vmatpush1.bf16.msra.mxu0 %v692
        %796 = vmatprep.subr.bf16.mxu0 0
        %797 = vmatpush1.bf16.msra.mxu0 %v693
        %798 = vmatprep.mubr.bf16.mxu0 %v755
        %799 = vmatmul.mubr.bf16.gmra.mrb[0].mxu0 %v754
        %v800 = vpop.f32.mrb[0].mxu0
        %v801 = vadd.f32 %v709, %v800
        %v802 = vpop.f32.mrb[0].mxu0
        %v803 = vpop.f32.mrb[0].mxu0
        %v804 = vadd.f32 %v714, %v803
        %v805 = vpop.f32.mrb[0].mxu0
        %806 = vmatprep.mubr.bf16.mxu0 %v757
        %807 = vmatmul.mubr.bf16.gmra.mrb[0].mxu0 %v756
        %v808 = vpop.f32.mrb[0].mxu0
        %v809 = vadd.f32 %v719, %v808
        %v810 = vpop.f32.mrb[0].mxu0
        %v811 = vpop.f32.mrb[0].mxu0
        %v812 = vadd.f32 %v724, %v811
        %v813 = vpop.f32.mrb[0].mxu0
        %814 = vmatprep.mubr.bf16.mxu0 %v759
        %815 = vmatmul.mubr.bf16.gmra.mrb[0].mxu0 %v758
        %v816 = vpop.f32.mrb[0].mxu0
        %v817 = vadd.f32 %v729, %v816
        %v818 = vpop.f32.mrb[0].mxu0
        %v819 = vpop.f32.mrb[0].mxu0
        %v820 = vadd.f32 %v734, %v819
        %v821 = vpop.f32.mrb[0].mxu0
        %822 = vdwg.mxu0
        %v823 = vxor.u32 %v801, 2147483648
        %v824 = vxor.u32 %v804, 2147483648
        %v825 = vxor.u32 %v809, 2147483648
        %v826 = vxor.u32 %v812, 2147483648
        %v827 = vxor.u32 %v817, 2147483648
        %v828 = vmul.f32 %v823, 1.442695
        %v829 = vpow.pop %v828
        %v830 = vmul.f32 %v824, 1.442695
        %v831 = vpow.pop %v830
        %v832 = vmul.f32 %v825, 1.442695
        %v833 = vpow.pop %v832
        %v834 = vmul.f32 %v826, 1.442695
        %v835 = vpow.pop %v834
        %v836 = vmul.f32 %v827, 1.442695
        %v837 = vpow.pop %v836
        %v838 = vadd.f32 %v829, 1.0
        %v839 = vadd.f32 %v831, 1.0
        %v840 = vadd.f32 %v833, 1.0
        %v841 = vadd.f32 %v835, 1.0
        %v842 = vadd.f32 %v837, 1.0
        %v843 = vrcp.pop %v838
        %v844 = vmul.f32 1.0, %v843
        %v845 = vrcp.pop %v839
        %v846 = vmul.f32 1.0, %v845
        %v847 = vrcp.pop %v840
        %v848 = vmul.f32 1.0, %v847
        %v849 = vrcp.pop %v841
        %v850 = vmul.f32 1.0, %v849
        %v851 = vrcp.pop %v842
        %v852 = vmul.f32 1.0, %v851
        %v853 = vmul.f32 %v801, %v844
        %v854 = vmul.f32 %v804, %v846
        %v855 = vmul.f32 %v809, %v848
        %v856 = vmul.f32 %v812, %v850
        %v857 = vmul.f32 %v817, %v852
        %v858 = vld [vmem:[%s4] sm:$0xf]
        %v859 = vpack.c.bf16 %v854, %v853
        %v860 = vpack.c.bf16 %v856, %v855
        %v861 = vpack.c.bf16 %v857, %v857
        %vm862 = vcmask 326656
        %v864 = vsel %vm862, %v858, 0
        %vm866 = vcmask 1043456
        %v868 = vsel %vm866, %v861, 0
        %870 = vmatprep.subr.bf16.mxu0 0
        %871 = vmatpush1.bf16.msra.mxu0 %v859
        %872 = vmatprep.subr.bf16.mxu0 0
        %873 = vmatpush1.bf16.msra.mxu0 %v860
        %874 = vmatprep.subr.bf16.mxu0 0
        %875 = vmatpush1.bf16.msra.mxu0 %v868
        %876 = vmatprep.subr.bf16.mxu0 0
        %877 = vmatpush1.bf16.msra.mxu0 0
        %878 = vmatprep.subr.bf16.mxu0 0
        %879 = vmatpush1.bf16.msra.mxu0 0
        %880 = vmatprep.subr.bf16.mxu0 0
        %881 = vmatpush1.bf16.msra.mxu0 0
        %882 = vmatprep.subr.bf16.mxu0 0
        %883 = vmatpush1.bf16.msra.mxu0 0
        %884 = vmatprep.subr.bf16.mxu0 0
        %885 = vmatpush1.bf16.msra.mxu0 0
        %886 = vmatprep.subr.bf16.mxu0 0
        %887 = vmatpush1.bf16.msra.mxu0 0
        %888 = vmatprep.subr.bf16.mxu0 0
        %889 = vmatpush1.bf16.msra.mxu0 0
        %890 = vmatprep.subr.bf16.mxu0 0
        %891 = vmatpush1.bf16.msra.mxu0 0
        %892 = vmatprep.subr.bf16.mxu0 0
        %893 = vmatpush1.bf16.msra.mxu0 0
        %894 = vmatprep.subr.bf16.mxu0 0
        %895 = vmatpush1.bf16.msra.mxu0 0
        %896 = vmatprep.subr.bf16.mxu0 0
        %897 = vmatpush1.bf16.msra.mxu0 0
        %898 = vmatprep.subr.bf16.mxu0 0
        %899 = vmatpush1.bf16.msra.mxu0 0
        %900 = vmatprep.subr.bf16.mxu0 0
        %901 = vmatpush1.bf16.msra.mxu0 0
        %902 = vmatprep.mubr.bf16.mxu0 0
        %903 = vmatmul.mubr.bf16.gmra.mrb[0].mxu0 %v864
        %v904 = vpop.f32.mrb[0].mxu0
        %v905 = vadd.f32 %v820, %v904
        %v906 = vpop.f32.mrb[0].mxu0
        %v907 = vpop.f32.mrb[0].mxu0
        %v908 = vpop.f32.mrb[0].mxu0
        %909 = vdwg.mxu0
        %v910 = vld [vmem:[%s5] sm:$0xff]
        %912 = vset.pattern.permute.xlu0 0
        %913 = vperm.xlu0 %912, %v910
        %v914 = vpop.permute.xlu0 %913
        %v916 = vadd.f32 %v905, %v914
        %v917 = vxor.u32 %v916, 2147483648
        %v918 = vmul.f32 %v917, 1.442695
        %v919 = vpow.pop %v918
        %v920 = vadd.f32 %v919, 1.0
        %v921 = vrcp.pop %v920
        %v922 = vmul.f32 1.0, %v921
        %v923 = vmul.f32 %v916, %v922
        %924 = vst.msk [vmem:[%s291] sm:$0xff] %vm484, %v923
        %s925 = sand.u32 %s182, 1
        %s926 = scalar_lea.sflag [#allocation4], %s925
        %s927 = sand.u32 %s182, 1
        %s928 = smul.addr %s927, 8
        %s929 = scalar_lea.vmem [#allocation3], %s928
        // Predicated region
        $region45: #{tpu_custom_call.1} parent=43 // pred_check
          %p930 = pneg %p192
        $region46: #{tpu_custom_call.1} parent=43 // pred_check_branch
          %932 = sbr.rel (%p930) target = $region48
        $region47: #{tpu_custom_call.1} parent=43 // pred_region
          %s934 = ssub.s32 128, 128
          %935 = vsyncadd %s926, %s934
          %s936 = sadd.s32 %s25, %s24
          %s937 = smul.addr %s936, 128
          %s938 = scalar_lea.hbm %s6, %s937
          %s940 = sshll.u32 %s929, 4
          %s941 = int_to_ptr.vmem [resolvable:$true] %s940
          %943 = dma.vmem_to_hbm [thread:$0]  %s941, 128, %s938, %s926
        $region48: #{tpu_custom_call.1} parent=43 // pred_fallthru
          _
      $region44: #{tpu_custom_call.1} parent=5 // pred_fallthru
        _
      %p944 = scmp.le.s32.totalorder 2, %s15
      // Predicated region
      $region49: #{tpu_custom_call.1} parent=5 // pred_check
        %p945 = pneg %p944
      $region50: #{tpu_custom_call.1} parent=5 // pred_check_branch
        %947 = sbr.rel (%p945) target = $region52
      $region51: #{tpu_custom_call.1} parent=5 // pred_region
        %s948 = ssub.s32 %s15, 2
        // Predicated region
        $region53: #{tpu_custom_call.1} parent=51 // pred_check
          %p949 = pneg %p198
        $region54: #{tpu_custom_call.1} parent=51 // pred_check_branch
          %951 = sbr.rel (%p949) target = $region56
        $region55: #{tpu_custom_call.1} parent=51 // pred_region
          %s952 = sand.u32 %s183, 1
          %s953 = scalar_lea.sflag [#allocation4], %s952
          %s954 = sand.u32 %s183, 1
          %s955 = smul.addr %s954, 8
          %s956 = scalar_lea.vmem [#allocation3], %s955
          %957 = dma.done %s953, 128
        $region56: #{tpu_custom_call.1} parent=51 // pred_fallthru
          _
      $region52: #{tpu_custom_call.1} parent=5 // pred_fallthru
        _
    $region6: #{tpu_custom_call.1} parent=1 // loop_footer
      %s19 = sadd.s32 1, %s15
    $region7: #{tpu_custom_call.1} parent=1 // loop_footer_branch
      %14 = sbr.rel target = $region3
    $region8: #{tpu_custom_call.1} parent=1 // loop_exit
      _
    %958 = vsyncpa [#allocation4], 1
    %s959 = scalar_lea.sflag [#allocation4], 1
    %960 = vsyncpa %s959, 1

</llo_original>
